<compile_context>
chip_gen: v5e
topology: v5e:2x2
jax: 0.10.0
libtpu: 0.0.40
codegen_flags: <defaults>
</compile_context>

<pallas_src>
import jax
import jax.numpy as jnp
from jax.experimental import pallas as pl
from jax.experimental.pallas import tpu as pltpu


def _round_up(x, m):
    return (x + m - 1) // m * m


def _mlp_head_kernel(x_ref, w1_ref, b1_ref, w2_ref, b2_ref, w3_ref, b3_ref, o_ref):
    # One row-tile of tokens; all three layers fused (matmul on MXU, bias +
    # ReLU on VPU), so intermediate activations never leave vregs/VMEM.
    x = x_ref[...]
    h = jnp.dot(x, w1_ref[...], preferred_element_type=jnp.float32) + b1_ref[...]
    h = jnp.maximum(h, 0.0)
    h = jnp.dot(h, w2_ref[...], preferred_element_type=jnp.float32) + b2_ref[...]
    h = jnp.maximum(h, 0.0)
    o = jnp.dot(h, w3_ref[...], preferred_element_type=jnp.float32) + b3_ref[...]
    o_ref[...] = o.astype(o_ref.dtype)


def mlp_prediction_head(x, params, *, tm_max=2048, lane=128):
    """x: (B, Q, input_dim) float32. params: dict with w1,b1,w2,b2,w3,b3."""
    B, Q, D_in = x.shape
    H = params["w1"].shape[1]
    D_out = params["w3"].shape[1]
    N = B * Q

    # ---- row-tile / grid selection --------------------------------------
    # Biggest tile up to tm_max (multiple of 8 sublanes); keep >=2 grid steps
    # when there is enough work so v7x megacore can split the row axis.
    # Ragged last tile is handled by Pallas masked boundary blocks (no padding
    # copy of x needed; garbage rows in the padded block never mix across rows
    # and their writes are dropped).
    tm = min(tm_max, _round_up(N, 8))
    n_steps = pl.cdiv(N, tm)
    if n_steps == 1 and N >= 256:
        tm = _round_up(pl.cdiv(N, 2), 8)
        n_steps = pl.cdiv(N, tm)

    x2d = x.reshape(N, D_in)

    # ---- lane-dense output: pad last layer to a 128-lane multiple --------
    D_pad = _round_up(max(D_out, lane), lane)
    w3 = jnp.pad(params["w3"], ((0, 0), (0, D_pad - D_out)))
    b3 = jnp.pad(params["b3"], (0, D_pad - D_out)).reshape(1, D_pad)

    w1, w2 = params["w1"], params["w2"]
    b1 = params["b1"].reshape(1, H)
    b2 = params["b2"].reshape(1, H)

    flops = 2 * N * (D_in * H + H * H + H * D_pad)
    bytes_accessed = 4 * (
        N * D_in                                                    # x
        + w1.size + w2.size + w3.size + b1.size + b2.size + b3.size
        + N * D_pad                                                 # padded out
    )

    out2d = pl.pallas_call(
        _mlp_head_kernel,
        out_shape=jax.ShapeDtypeStruct((N, D_pad), x.dtype),
        grid_spec=pltpu.PrefetchScalarGridSpec(
            num_scalar_prefetch=0,
            grid=(n_steps,),
            in_specs=[
                pl.BlockSpec((tm, D_in), lambda i: (i, 0)),     # x tile
                pl.BlockSpec((D_in, H), lambda i: (0, 0)),      # w1 (resident)
                pl.BlockSpec((1, H), lambda i: (0, 0)),         # b1
                pl.BlockSpec((H, H), lambda i: (0, 0)),         # w2
                pl.BlockSpec((1, H), lambda i: (0, 0)),         # b2
                pl.BlockSpec((H, D_pad), lambda i: (0, 0)),     # w3 (lane-padded)
                pl.BlockSpec((1, D_pad), lambda i: (0, 0)),     # b3 (lane-padded)
            ],
            out_specs=pl.BlockSpec((tm, D_pad), lambda i: (i, 0)),
        ),
        compiler_params=pltpu.CompilerParams(
            dimension_semantics=("parallel",)),
        cost_estimate=pl.CostEstimate(
            flops=flops, transcendentals=0, bytes_accessed=bytes_accessed),
    )(x2d, w1, b1, w2, b2, w3, b3)

    return out2d[:, :D_out].reshape(B, Q, D_out)


def init_params(key, input_dim, hidden_dim, output_dim):
    # Deterministic synthetic init (shapes match nn.Linear weights, but stored
    # transposed as (in, out) for the x @ W convention).
    ks = jax.random.split(key, 6)
    scale = 0.1
    return {
        "w1": scale * jax.random.normal(ks[0], (input_dim, hidden_dim), jnp.float32),
        "b1": scale * jax.random.normal(ks[1], (hidden_dim,), jnp.float32),
        "w2": scale * jax.random.normal(ks[2], (hidden_dim, hidden_dim), jnp.float32),
        "b2": scale * jax.random.normal(ks[3], (hidden_dim,), jnp.float32),
        "w3": scale * jax.random.normal(ks[4], (hidden_dim, output_dim), jnp.float32),
        "b3": scale * jax.random.normal(ks[5], (output_dim,), jnp.float32),
    }


def reference_mlp(x, p):
    h = jax.nn.relu(x @ p["w1"] + p["b1"])
    h = jax.nn.relu(h @ p["w2"] + p["b2"])
    return h @ p["w3"] + p["b3"]


if __name__ == "__main__":
    key = jax.random.PRNGKey(0)
    k_x, k_x2, k_p = jax.random.split(key, 3)

    input_dim, hidden_dim, output_dim = 32, 32, 4  # num_layers = 3
    params = init_params(k_p, input_dim, hidden_dim, output_dim)

    head = jax.jit(mlp_prediction_head)

    # Small smoke-test shape (single grid step).
    batch, num_queries = 2, 8
    x = jax.random.normal(k_x, (batch, num_queries, input_dim), jnp.float32)
    out = jax.block_until_ready(head(x, params))
    ref = reference_mlp(x, params)
    assert out.shape == (batch, num_queries, output_dim)
    assert jnp.allclose(out, ref, atol=1e-5, rtol=1e-5)

    # Realistic DETR shape (2 x 300 queries): exercises multi-step grid,
    # megacore-friendly tiling, and the masked ragged last row-tile
    # (2 steps x 304 rows covering 600 tokens).
    x_big = jax.random.normal(k_x2, (2, 300, input_dim), jnp.float32)
    out_big = jax.block_until_ready(head(x_big, params))
    ref_big = reference_mlp(x_big, params)
    assert out_big.shape == (2, 300, output_dim)
    assert jnp.allclose(out_big, ref_big, atol=1e-5, rtol=1e-5)

    print("KERNEL_OK")
</pallas_src>

<mosaic_0001>
module attributes {stable_mosaic.version = 11 : i64} {
  func.func @_mlp_head_kernel(%arg0: i32, %arg1: memref<16x32xf32, #tpu.memory_space<vmem>>, %arg2: memref<32x32xf32, #tpu.memory_space<vmem>>, %arg3: memref<1x32xf32, #tpu.memory_space<vmem>>, %arg4: memref<32x32xf32, #tpu.memory_space<vmem>>, %arg5: memref<1x32xf32, #tpu.memory_space<vmem>>, %arg6: memref<32x128xf32, #tpu.memory_space<vmem>>, %arg7: memref<1x128xf32, #tpu.memory_space<vmem>>, %arg8: memref<16x128xf32, #tpu.memory_space<vmem>>) attributes {dimension_semantics = [#tpu.dimension_semantics<parallel>], iteration_bounds = array<i64: 1>, scalar_prefetch = 0 : i64, scratch_operands = 0 : i64, tpu.core_type = #tpu.core_type<tc>, window_params = [{transform_indices = @transform_0, window_bounds = array<i64: 16, 32>}, {pipeline_mode = #tpu.pipeline_mode<synchronous>, transform_indices = @transform_1, window_bounds = array<i64: 32, 32>}, {pipeline_mode = #tpu.pipeline_mode<synchronous>, transform_indices = @transform_2, window_bounds = array<i64: 1, 32>}, {pipeline_mode = #tpu.pipeline_mode<synchronous>, transform_indices = @transform_3, window_bounds = array<i64: 32, 32>}, {pipeline_mode = #tpu.pipeline_mode<synchronous>, transform_indices = @transform_4, window_bounds = array<i64: 1, 32>}, {pipeline_mode = #tpu.pipeline_mode<synchronous>, transform_indices = @transform_5, window_bounds = array<i64: 32, 128>}, {pipeline_mode = #tpu.pipeline_mode<synchronous>, transform_indices = @transform_6, window_bounds = array<i64: 1, 128>}, {transform_indices = @transform_7, window_bounds = array<i64: 16, 128>}]} {
    %c0 = arith.constant 0 : index
    %c0_0 = arith.constant 0 : index
    %0 = vector.load %arg1[%c0, %c0_0] : memref<16x32xf32, #tpu.memory_space<vmem>>, vector<16x32xf32>
    %c0_1 = arith.constant 0 : index
    %c0_2 = arith.constant 0 : index
    %1 = vector.load %arg2[%c0_1, %c0_2] : memref<32x32xf32, #tpu.memory_space<vmem>>, vector<32x32xf32>
    %cst = arith.constant dense<0.000000e+00> : vector<16x32xf32>
    %2 = tpu.matmul %0, %1, %cst {dimension_numbers = #tpu.dot_dimension_numbers<[1], [0], [0], [1], [0, 0, 1, 1], [], []>} : vector<16x32xf32>, vector<32x32xf32>, vector<16x32xf32> -> vector<16x32xf32>
    %c0_3 = arith.constant 0 : index
    %c0_4 = arith.constant 0 : index
    %3 = vector.load %arg3[%c0_3, %c0_4] : memref<1x32xf32, #tpu.memory_space<vmem>>, vector<1x32xf32>
    %4 = vector.broadcast %3 : vector<1x32xf32> to vector<16x32xf32>
    %5 = arith.addf %2, %4 : vector<16x32xf32>
    %cst_5 = arith.constant 0.000000e+00 : f32
    %6 = vector.broadcast %cst_5 : f32 to vector<16x32xf32>
    %7 = arith.maximumf %5, %6 : vector<16x32xf32>
    %c0_6 = arith.constant 0 : index
    %c0_7 = arith.constant 0 : index
    %8 = vector.load %arg4[%c0_6, %c0_7] : memref<32x32xf32, #tpu.memory_space<vmem>>, vector<32x32xf32>
    %cst_8 = arith.constant dense<0.000000e+00> : vector<16x32xf32>
    %9 = tpu.matmul %7, %8, %cst_8 {dimension_numbers = #tpu.dot_dimension_numbers<[1], [0], [0], [1], [0, 0, 1, 1], [], []>} : vector<16x32xf32>, vector<32x32xf32>, vector<16x32xf32> -> vector<16x32xf32>
    %c0_9 = arith.constant 0 : index
    %c0_10 = arith.constant 0 : index
    %10 = vector.load %arg5[%c0_9, %c0_10] : memref<1x32xf32, #tpu.memory_space<vmem>>, vector<1x32xf32>
    %11 = vector.broadcast %10 : vector<1x32xf32> to vector<16x32xf32>
    %12 = arith.addf %9, %11 : vector<16x32xf32>
    %cst_11 = arith.constant 0.000000e+00 : f32
    %13 = vector.broadcast %cst_11 : f32 to vector<16x32xf32>
    %14 = arith.maximumf %12, %13 : vector<16x32xf32>
    %c0_12 = arith.constant 0 : index
    %c0_13 = arith.constant 0 : index
    %15 = vector.load %arg6[%c0_12, %c0_13] : memref<32x128xf32, #tpu.memory_space<vmem>>, vector<32x128xf32>
    %cst_14 = arith.constant dense<0.000000e+00> : vector<16x128xf32>
    %16 = tpu.matmul %14, %15, %cst_14 {dimension_numbers = #tpu.dot_dimension_numbers<[1], [0], [0], [1], [0, 0, 1, 1], [], []>} : vector<16x32xf32>, vector<32x128xf32>, vector<16x128xf32> -> vector<16x128xf32>
    %c0_15 = arith.constant 0 : index
    %c0_16 = arith.constant 0 : index
    %17 = vector.load %arg7[%c0_15, %c0_16] : memref<1x128xf32, #tpu.memory_space<vmem>>, vector<1x128xf32>
    %18 = vector.broadcast %17 : vector<1x128xf32> to vector<16x128xf32>
    %19 = arith.addf %16, %18 : vector<16x128xf32>
    %c0_17 = arith.constant 0 : index
    %c0_18 = arith.constant 0 : index
    %20 = vector.load %arg8[%c0_17, %c0_18] : memref<16x128xf32, #tpu.memory_space<vmem>>, vector<16x128xf32>
    tpu.vector_store %arg8[%c0_17, %c0_18], %19 {strides = array<i32>} : memref<16x128xf32, #tpu.memory_space<vmem>>, vector<16x128xf32>,
    return
  }
  func.func @transform_0(%arg0: i32) -> (i32, i32) {
    %c0_i32 = arith.constant 0 : i32
    %c0_i32_0 = arith.constant 0 : i32
    return %arg0, %c0_i32 : i32, i32
  }
  func.func @transform_1(%arg0: i32) -> (i32, i32) {
    %c0_i32 = arith.constant 0 : i32
    %c0_i32_0 = arith.constant 0 : i32
    %c0_i32_1 = arith.constant 0 : i32
    return %c0_i32, %c0_i32_0 : i32, i32
  }
  func.func @transform_2(%arg0: i32) -> (i32, i32) {
    %c0_i32 = arith.constant 0 : i32
    %c0_i32_0 = arith.constant 0 : i32
    %c0_i32_1 = arith.constant 0 : i32
    return %c0_i32, %c0_i32_0 : i32, i32
  }
  func.func @transform_3(%arg0: i32) -> (i32, i32) {
    %c0_i32 = arith.constant 0 : i32
    %c0_i32_0 = arith.constant 0 : i32
    %c0_i32_1 = arith.constant 0 : i32
    return %c0_i32, %c0_i32_0 : i32, i32
  }
  func.func @transform_4(%arg0: i32) -> (i32, i32) {
    %c0_i32 = arith.constant 0 : i32
    %c0_i32_0 = arith.constant 0 : i32
    %c0_i32_1 = arith.constant 0 : i32
    return %c0_i32, %c0_i32_0 : i32, i32
  }
  func.func @transform_5(%arg0: i32) -> (i32, i32) {
    %c0_i32 = arith.constant 0 : i32
    %c0_i32_0 = arith.constant 0 : i32
    %c0_i32_1 = arith.constant 0 : i32
    return %c0_i32, %c0_i32_0 : i32, i32
  }
  func.func @transform_6(%arg0: i32) -> (i32, i32) {
    %c0_i32 = arith.constant 0 : i32
    %c0_i32_0 = arith.constant 0 : i32
    %c0_i32_1 = arith.constant 0 : i32
    return %c0_i32, %c0_i32_0 : i32, i32
  }
  func.func @transform_7(%arg0: i32) -> (i32, i32) {
    %c0_i32 = arith.constant 0 : i32
    %c0_i32_0 = arith.constant 0 : i32
    return %arg0, %c0_i32 : i32, i32
  }
}

</mosaic_0001>

<llo_original>
// kernel: mlp_prediction_head.1
$region0: #{mlp_prediction_head.1}
  #allocation0 [shape = 'u32[]', space=smem, size = 0x4, offset = 0x4, fixed_abs, tag = 'smem constant byte address 0x4 - core index']
  #allocation1 [shape = 'u32[72,128]{1,0:T(1,128)}', space=vmem, size = 0x9000, scoped, tag = 'internal scratch']
  %s0 = inlined_call_operand.vmem [shape: f32[16,32], index: 0, kind: input, shape index: {}]
  %s1 = inlined_call_operand.vmem [shape: f32[32,32], index: 1, kind: input, shape index: {}]
  %s2 = inlined_call_operand.vmem [shape: f32[1,32], index: 2, kind: input, shape index: {}]
  %s3 = inlined_call_operand.vmem [shape: f32[32,32], index: 3, kind: input, shape index: {}]
  %s4 = inlined_call_operand.vmem [shape: f32[1,32], index: 4, kind: input, shape index: {}]
  %s5 = inlined_call_operand.vmem [shape: f32[32,128], index: 5, kind: input, shape index: {}]
  %s6 = inlined_call_operand.vmem [shape: f32[1,128], index: 6, kind: input, shape index: {}]
  %s7 = inlined_call_operand.vmem [shape: f32[16,128], index: 7, kind: output, shape index: {}]
  %s8 = sld [smem:[#allocation0]]
  $region38: #{mlp_prediction_head.1} parent=0
    _
  %s10 = ssub.s32 1, %s8
  %s11 = scalar_select 0, %s10, %s8
  // Predicated region
  $region2: #{mlp_prediction_head.1} parent=0 // pred_check
    _
  $region3: #{mlp_prediction_head.1} parent=0 // pred_check_branch
    %13 = sbr.rel (0) target = $region5
  $region4: #{mlp_prediction_head.1} parent=0 // pred_region
    _
  $region5: #{mlp_prediction_head.1} parent=0 // pred_fallthru
    _
  // Predicated region
  $region6: #{mlp_prediction_head.1} parent=0 // pred_check
    _
  $region7: #{mlp_prediction_head.1} parent=0 // pred_check_branch
    %15 = sbr.rel (0) target = $region9
  $region8: #{mlp_prediction_head.1} parent=0 // pred_region
    _
  $region9: #{mlp_prediction_head.1} parent=0 // pred_fallthru
    _
  // Predicated region
  $region10: #{mlp_prediction_head.1} parent=0 // pred_check
    _
  $region11: #{mlp_prediction_head.1} parent=0 // pred_check_branch
    %17 = sbr.rel (0) target = $region13
  $region12: #{mlp_prediction_head.1} parent=0 // pred_region
    _
  $region13: #{mlp_prediction_head.1} parent=0 // pred_fallthru
    _
  // Predicated region
  $region14: #{mlp_prediction_head.1} parent=0 // pred_check
    _
  $region15: #{mlp_prediction_head.1} parent=0 // pred_check_branch
    %19 = sbr.rel (0) target = $region17
  $region16: #{mlp_prediction_head.1} parent=0 // pred_region
    _
  $region17: #{mlp_prediction_head.1} parent=0 // pred_fallthru
    _
  // Predicated region
  $region18: #{mlp_prediction_head.1} parent=0 // pred_check
    _
  $region19: #{mlp_prediction_head.1} parent=0 // pred_check_branch
    %21 = sbr.rel (0) target = $region21
  $region20: #{mlp_prediction_head.1} parent=0 // pred_region
    _
  $region21: #{mlp_prediction_head.1} parent=0 // pred_fallthru
    _
  // Predicated region
  $region22: #{mlp_prediction_head.1} parent=0 // pred_check
    _
  $region23: #{mlp_prediction_head.1} parent=0 // pred_check_branch
    %23 = sbr.rel (0) target = $region25
  $region24: #{mlp_prediction_head.1} parent=0 // pred_region
    _
  $region25: #{mlp_prediction_head.1} parent=0 // pred_fallthru
    _
  // Predicated region
  $region26: #{mlp_prediction_head.1} parent=0 // pred_check
    _
  $region27: #{mlp_prediction_head.1} parent=0 // pred_check_branch
    %25 = sbr.rel (0) target = $region29
  $region28: #{mlp_prediction_head.1} parent=0 // pred_region
    _
  $region29: #{mlp_prediction_head.1} parent=0 // pred_fallthru
    _
  %v26 = vld [vmem:[%s0] sm:$0xff]
  %v27 = vld [vmem:[%s0 + $0x8] sm:$0xff]
  %v28 = vld [vmem:[%s1] sm:$0xff]
  %v29 = vld [vmem:[%s1 + $0x8] sm:$0xff]
  %v30 = vld [vmem:[%s1 + $0x10] sm:$0xff]
  %v31 = vld [vmem:[%s1 + $0x18] sm:$0xff]
  %v32 = vld [vmem:[%s2] sm:$0x1]
  %v34 = vperm.slane %v32, 0
  %vm36 = vcmask 261120
  %v38 = vsel %vm36, %v26, 0
  %v41 = vsel %vm36, %v27, 0
  %43 = vmatpush.msra.mxu0 0.0
  %44 = vmatpush.msra.mxu0 0.0
  %45 = vmatpush.msra.mxu0 0.0
  %46 = vmatpush.msra.mxu0 0.0
  %47 = vmatpush.msra.mxu0 0.0
  %48 = vmatpush.msra.mxu0 0.0
  %49 = vmatpush.msra.mxu0 0.0
  %50 = vmatpush.msra.mxu0 0.0
  %51 = vmatpush.msra.mxu0 0.0
  %52 = vmatpush.msra.mxu0 0.0
  %53 = vmatpush.msra.mxu0 0.0
  %54 = vmatpush.msra.mxu0 0.0
  %55 = vmatpush.msra.mxu0 %v31
  %56 = vmatpush.msra.mxu0 %v30
  %57 = vmatpush.msra.mxu0 %v29
  %58 = vmatpush.msra.mxu0 %v28
  %59 = vmatmul.f32.gmra.mxu0 %v38
  %v60 = vpop.f32.mrf.mxu0
  %v61 = vadd.f32 %v34, %v60
  %62 = vmatmul.f32.gmra.mxu0 %v41
  %v63 = vpop.f32.mrf.mxu0
  %v64 = vadd.f32 %v34, %v63
  %65 = vdwg.mxu0
  %v66 = vmax.f32 %v61, 0.0
  %v67 = vmax.f32 %v64, 0.0
  %v68 = vld [vmem:[%s3] sm:$0xff]
  %v69 = vld [vmem:[%s3 + $0x8] sm:$0xff]
  %v70 = vld [vmem:[%s3 + $0x10] sm:$0xff]
  %v71 = vld [vmem:[%s3 + $0x18] sm:$0xff]
  %v72 = vld [vmem:[%s4] sm:$0x1]
  %v74 = vperm.slane %v72, 0
  %v77 = vsel %vm36, %v66, 0
  %v80 = vsel %vm36, %v67, 0
  %82 = vmatpush.msra.mxu0 0.0
  %83 = vmatpush.msra.mxu0 0.0
  %84 = vmatpush.msra.mxu0 0.0
  %85 = vmatpush.msra.mxu0 0.0
  %86 = vmatpush.msra.mxu0 0.0
  %87 = vmatpush.msra.mxu0 0.0
  %88 = vmatpush.msra.mxu0 0.0
  %89 = vmatpush.msra.mxu0 0.0
  %90 = vmatpush.msra.mxu0 0.0
  %91 = vmatpush.msra.mxu0 0.0
  %92 = vmatpush.msra.mxu0 0.0
  %93 = vmatpush.msra.mxu0 0.0
  %94 = vmatpush.msra.mxu0 %v71
  %95 = vmatpush.msra.mxu0 %v70
  %96 = vmatpush.msra.mxu0 %v69
  %97 = vmatpush.msra.mxu0 %v68
  %98 = vmatmul.f32.gmra.mxu0 %v77
  %v99 = vpop.f32.mrf.mxu0
  %v100 = vadd.f32 %v74, %v99
  %101 = vmatmul.f32.gmra.mxu0 %v80
  %v102 = vpop.f32.mrf.mxu0
  %v103 = vadd.f32 %v74, %v102
  %104 = vdwg.mxu0
  %v105 = vmax.f32 %v100, 0.0
  %v106 = vmax.f32 %v103, 0.0
  %v107 = vld [vmem:[%s5] sm:$0xff]
  %v108 = vld [vmem:[%s5 + $0x8] sm:$0xff]
  %v109 = vld [vmem:[%s5 + $0x10] sm:$0xff]
  %v110 = vld [vmem:[%s5 + $0x18] sm:$0xff]
  %v111 = vld [vmem:[%s6] sm:$0x1]
  %v113 = vperm.slane %v111, 0
  %v116 = vsel %vm36, %v105, 0
  %v119 = vsel %vm36, %v106, 0
  %121 = vmatpush.msra.mxu0 0.0
  %122 = vmatpush.msra.mxu0 0.0
  %123 = vmatpush.msra.mxu0 0.0
  %124 = vmatpush.msra.mxu0 0.0
  %125 = vmatpush.msra.mxu0 0.0
  %126 = vmatpush.msra.mxu0 0.0
  %127 = vmatpush.msra.mxu0 0.0
  %128 = vmatpush.msra.mxu0 0.0
  %129 = vmatpush.msra.mxu0 0.0
  %130 = vmatpush.msra.mxu0 0.0
  %131 = vmatpush.msra.mxu0 0.0
  %132 = vmatpush.msra.mxu0 0.0
  %133 = vmatpush.msra.mxu0 %v110
  %134 = vmatpush.msra.mxu0 %v109
  %135 = vmatpush.msra.mxu0 %v108
  %136 = vmatpush.msra.mxu0 %v107
  %137 = vmatmul.f32.gmra.mxu0 %v116
  %v138 = vpop.f32.mrf.mxu0
  %v139 = vadd.f32 %v113, %v138
  %140 = vmatmul.f32.gmra.mxu0 %v119
  %v141 = vpop.f32.mrf.mxu0
  %v142 = vadd.f32 %v113, %v141
  %143 = vdwg.mxu0
  %144 = vst [vmem:[%s7] sm:$0xff] %v139
  %145 = vst [vmem:[%s7 + $0x8] sm:$0xff] %v142
  // Predicated region
  $region30: #{mlp_prediction_head.1} parent=0 // pred_check
    _
  $region31: #{mlp_prediction_head.1} parent=0 // pred_check_branch
    %147 = sbr.rel (0) target = $region33
  $region32: #{mlp_prediction_head.1} parent=0 // pred_region
    _
  $region33: #{mlp_prediction_head.1} parent=0 // pred_fallthru
    _
  // Predicated region
  $region34: #{mlp_prediction_head.1} parent=0 // pred_check
    _
  $region35: #{mlp_prediction_head.1} parent=0 // pred_check_branch
    %149 = sbr.rel (0) target = $region37
  $region36: #{mlp_prediction_head.1} parent=0 // pred_region
    _
  $region37: #{mlp_prediction_head.1} parent=0 // pred_fallthru
    _

</llo_original>
